<compile_context>
chip_gen: v7x
topology: tpu7x:2x2x1
jax: 0.10.0
libtpu: 0.0.40
codegen_flags: <defaults>
</compile_context>

<pallas_src>
import math

import jax
import jax.numpy as jnp
from jax import lax
from jax.experimental import pallas as pl
from jax.experimental.pallas import tpu as pltpu

# x:(B,K) contracted with w:(N,K) on their last axes -> (B,N)
_CONTRACT_IN = (((1,), (1,)), ((), ()))


# ---------------------------------------------------------------------------
# Kernel
# ---------------------------------------------------------------------------
def _fused_mlp_kernel(x_ref, w1_ref, b1_ref, w2_ref, b2_ref, out_ref):
    """out = relu(x @ W1^T + b1) @ W2^T + b2   (BN already folded into W2/b2)."""
    x = x_ref[...]
    h = lax.dot_general(x, w1_ref[...], _CONTRACT_IN,
                        preferred_element_type=jnp.float32) + b1_ref[...]
    h = jnp.maximum(h, 0.0)
    y = lax.dot_general(h, w2_ref[...], _CONTRACT_IN,
                        preferred_element_type=jnp.float32) + b2_ref[...]
    out_ref[...] = y.astype(out_ref.dtype)


# ---------------------------------------------------------------------------
# Wrappers
# ---------------------------------------------------------------------------
def encoders_forward(x_pair, w1s, b1s, w2s, b2s):
    """Run the 4 encoder applications in a single gridded pallas_call.

    x_pair : (2, B, n_in)   [x_bulk, x_sc]
    w1s    : (3, h0, n_in)  first-linear weights of [bulk, sc, share] encoders
    b1s    : (3, 1, h0)
    w2s    : (3, h1, h0)    BN-folded second-linear weights
    b2s    : (3, 1, h1)
    returns (4, B, h1) in order [z_bulk_p, z_sc_p, z_bulk_s, z_sc_s]
    """
    _, B, n_in = x_pair.shape
    h0 = w1s.shape[1]
    h1 = w2s.shape[1]

    x_map = lambda i: (i % 2, 0, 0)                # bulk / sc input
    w_map = lambda i: (jnp.minimum(i, 2), 0, 0)    # bulk, sc, share, share
    o_map = lambda i: (i, 0, 0)

    return pl.pallas_call(
        _fused_mlp_kernel,
        out_shape=jax.ShapeDtypeStruct((4, B, h1), jnp.float32),
        grid_spec=pltpu.PrefetchScalarGridSpec(
            num_scalar_prefetch=0,
            grid=(4,),
            in_specs=[
                pl.BlockSpec((None, B, n_in), x_map),
                pl.BlockSpec((None, h0, n_in), w_map),
                pl.BlockSpec((None, 1, h0), w_map),
                pl.BlockSpec((None, h1, h0), w_map),
                pl.BlockSpec((None, 1, h1), w_map),
            ],
            out_specs=pl.BlockSpec((None, B, h1), o_map),
        ),
        compiler_params=pltpu.CompilerParams(
            dimension_semantics=("parallel",)),
    )(x_pair, w1s, b1s, w2s, b2s)


def fused_mlp(x, w1, b1, w2, b2):
    """Single fused (Linear -> ReLU -> folded-BN Linear) call, whole-array VMEM.

    Shapes here are tiny; for realistic sc/bulk sizes this wrapper would gain a
    (B, N, K) grid with bf16 MXU inputs and an f32 VMEM accumulator.
    """
    B = x.shape[0]
    d_out = w2.shape[0]
    vmem = pl.BlockSpec(memory_space=pltpu.MemorySpace.VMEM)
    return pl.pallas_call(
        _fused_mlp_kernel,
        out_shape=jax.ShapeDtypeStruct((B, d_out), jnp.float32),
        in_specs=[vmem] * 5,
        out_specs=vmem,
    )(x, w1, b1.reshape(1, -1), w2, b2.reshape(1, -1))


# ---------------------------------------------------------------------------
# Parameters (PyTorch-like default init) + eval-mode BN folding
# ---------------------------------------------------------------------------
_BN_EPS = 1e-5


def _linear_params(key, d_in, d_out):
    kw, kb = jax.random.split(key)
    bound = 1.0 / math.sqrt(d_in)
    w = jax.random.uniform(kw, (d_out, d_in), jnp.float32, -bound, bound)
    b = jax.random.uniform(kb, (d_out,), jnp.float32, -bound, bound)
    return w, b


def _mlp_raw_params(key, d_in, hidden, d_out):
    """Linear(d_in,hidden) -> ReLU -> BN(hidden) -> Dropout -> Linear(hidden,d_out)."""
    k1, k2 = jax.random.split(key)
    w1, b1 = _linear_params(k1, d_in, hidden)
    w2, b2 = _linear_params(k2, hidden, d_out)
    return dict(
        w1=w1, b1=b1, w2=w2, b2=b2,
        gamma=jnp.ones((hidden,), jnp.float32),
        beta=jnp.zeros((hidden,), jnp.float32),
        mean=jnp.zeros((hidden,), jnp.float32),
        var=jnp.ones((hidden,), jnp.float32),
    )


def _fold_bn(p):
    """Fold eval-mode BN into the second linear:  W2' = W2*scale, b2' = b2 + W2@shift."""
    scale = p["gamma"] / jnp.sqrt(p["var"] + _BN_EPS)
    shift = p["beta"] - p["mean"] * scale
    return dict(w1=p["w1"], b1=p["b1"],
                w2=p["w2"] * scale[None, :],
                b2=p["b2"] + p["w2"] @ shift)


def make_model2_params(key, n_input, n_hidden):
    h0, h1 = n_hidden
    keys = jax.random.split(key, 4)
    raw = {
        "bulk_encoder": _mlp_raw_params(keys[0], n_input, h0, h1),
        "sc_encoder": _mlp_raw_params(keys[1], n_input, h0, h1),
        "share_encoder": _mlp_raw_params(keys[2], n_input, h0, h1),
        "decoder": _mlp_raw_params(keys[3], 2 * h1, h0, n_input),
    }
    folded = {name: _fold_bn(p) for name, p in raw.items()}
    enc_names = ("bulk_encoder", "sc_encoder", "share_encoder")
    enc_stack = dict(
        w1=jnp.stack([folded[n]["w1"] for n in enc_names]),            # (3,h0,n_in)
        b1=jnp.stack([folded[n]["b1"] for n in enc_names])[:, None, :],  # (3,1,h0)
        w2=jnp.stack([folded[n]["w2"] for n in enc_names]),            # (3,h1,h0)
        b2=jnp.stack([folded[n]["b2"] for n in enc_names])[:, None, :],  # (3,1,h1)
    )
    return dict(raw=raw, enc_stack=enc_stack, decoder=folded["decoder"])


# ---------------------------------------------------------------------------
# model2 forward (eval mode)
# ---------------------------------------------------------------------------
def model2_forward(params, x_bulk, x_sc):
    B = x_bulk.shape[0]
    enc = params["enc_stack"]
    h1 = enc["w2"].shape[1]

    x_pair = jnp.stack([x_bulk, x_sc])                                  # (2,B,n_in)
    z_enc = encoders_forward(x_pair, enc["w1"], enc["b1"], enc["w2"], enc["b2"])
    z_bulk_p, z_sc_p, z_bulk_s, z_sc_s = z_enc[0], z_enc[1], z_enc[2], z_enc[3]

    # z_bulk = cat(z_bulk_p, z_bulk_s, dim=1); z_sc likewise; stack on batch
    z_all = (z_enc.reshape(2, 2, B, h1)      # (p/s, bulk/sc, B, h1)
                  .transpose(1, 2, 0, 3)     # (bulk/sc, B, p/s, h1)
                  .reshape(2 * B, 2 * h1))

    dec = params["decoder"]
    x_bar = fused_mlp(z_all, dec["w1"], dec["b1"], dec["w2"], dec["b2"])
    x_bulk_bar, x_sc_bar = x_bar[:B], x_bar[B:]
    return [z_bulk_s, z_sc_s, z_bulk_p, z_sc_p, x_bulk_bar, x_sc_bar]


# ---------------------------------------------------------------------------
# Pure-JAX reference (un-folded BN) for correctness checking
# ---------------------------------------------------------------------------
def _mlp_ref(p, x):
    h = jnp.dot(x, p["w1"].T, precision=lax.Precision.HIGHEST) + p["b1"]
    h = jnp.maximum(h, 0.0)
    h = (h - p["mean"]) / jnp.sqrt(p["var"] + _BN_EPS) * p["gamma"] + p["beta"]
    return jnp.dot(h, p["w2"].T, precision=lax.Precision.HIGHEST) + p["b2"]


def reference_forward(raw, x_bulk, x_sc):
    z_bulk_p = _mlp_ref(raw["bulk_encoder"], x_bulk)
    z_sc_p = _mlp_ref(raw["sc_encoder"], x_sc)
    z_bulk_s = _mlp_ref(raw["share_encoder"], x_bulk)
    z_sc_s = _mlp_ref(raw["share_encoder"], x_sc)
    z_bulk = jnp.concatenate((z_bulk_p, z_bulk_s), axis=1)
    z_sc = jnp.concatenate((z_sc_p, z_sc_s), axis=1)
    x_bulk_bar = _mlp_ref(raw["decoder"], z_bulk)
    x_sc_bar = _mlp_ref(raw["decoder"], z_sc)
    return [z_bulk_s, z_sc_s, z_bulk_p, z_sc_p, x_bulk_bar, x_sc_bar]


# ---------------------------------------------------------------------------
# Main
# ---------------------------------------------------------------------------
if __name__ == "__main__":
    key = jax.random.PRNGKey(0)
    k_params, k_bulk, k_sc = jax.random.split(key, 3)

    batch = 8
    n_input = 32
    n_hidden = [32, 16]

    params = make_model2_params(k_params, n_input, n_hidden)
    x_bulk = jax.random.normal(k_bulk, (batch, n_input), jnp.float32)
    x_sc = jax.random.normal(k_sc, (batch, n_input), jnp.float32)

    outs = jax.block_until_ready(jax.jit(model2_forward)(params, x_bulk, x_sc))

    z_bulk_s, z_sc_s, z_bulk_p, z_sc_p, x_bulk_bar, x_sc_bar = outs
    assert z_bulk_s.shape == (batch, n_hidden[1])
    assert z_sc_s.shape == (batch, n_hidden[1])
    assert z_bulk_p.shape == (batch, n_hidden[1])
    assert z_sc_p.shape == (batch, n_hidden[1])
    assert x_bulk_bar.shape == (batch, n_input)
    assert x_sc_bar.shape == (batch, n_input)

    refs = reference_forward(params["raw"], x_bulk, x_sc)
    for got, want in zip(outs, refs):
        assert jnp.allclose(got, want, atol=1e-3, rtol=1e-3), (
            float(jnp.max(jnp.abs(got - want))))

    print("KERNEL_OK")
</pallas_src>

<mosaic_0001>
module attributes {stable_mosaic.version = 11 : i64} {
  func.func @_fused_mlp_kernel(%arg0: memref<16x32xf32, #tpu.memory_space<vmem>>, %arg1: memref<32x32xf32, #tpu.memory_space<vmem>>, %arg2: memref<1x32xf32, #tpu.memory_space<vmem>>, %arg3: memref<32x32xf32, #tpu.memory_space<vmem>>, %arg4: memref<1x32xf32, #tpu.memory_space<vmem>>, %arg5: memref<16x32xf32, #tpu.memory_space<vmem>>) attributes {dimension_semantics = [], scalar_prefetch = 0 : i64, scratch_operands = 0 : i64, tpu.core_type = #tpu.core_type<tc>} {
    %c0 = arith.constant 0 : index
    %c0_0 = arith.constant 0 : index
    %0 = vector.load %arg0[%c0, %c0_0] : memref<16x32xf32, #tpu.memory_space<vmem>>, vector<16x32xf32>
    %c0_1 = arith.constant 0 : index
    %c0_2 = arith.constant 0 : index
    %1 = vector.load %arg1[%c0_1, %c0_2] : memref<32x32xf32, #tpu.memory_space<vmem>>, vector<32x32xf32>
    %cst = arith.constant dense<0.000000e+00> : vector<16x32xf32>
    %2 = tpu.matmul %0, %1, %cst {dimension_numbers = #tpu.dot_dimension_numbers<[1], [1], [0], [0], [0, 0, 1, 0], [], []>} : vector<16x32xf32>, vector<32x32xf32>, vector<16x32xf32> -> vector<16x32xf32>
    %c0_3 = arith.constant 0 : index
    %c0_4 = arith.constant 0 : index
    %3 = vector.load %arg2[%c0_3, %c0_4] : memref<1x32xf32, #tpu.memory_space<vmem>>, vector<1x32xf32>
    %4 = vector.broadcast %3 : vector<1x32xf32> to vector<16x32xf32>
    %5 = arith.addf %2, %4 : vector<16x32xf32>
    %cst_5 = arith.constant 0.000000e+00 : f32
    %6 = vector.broadcast %cst_5 : f32 to vector<16x32xf32>
    %7 = arith.maximumf %5, %6 : vector<16x32xf32>
    %c0_6 = arith.constant 0 : index
    %c0_7 = arith.constant 0 : index
    %8 = vector.load %arg3[%c0_6, %c0_7] : memref<32x32xf32, #tpu.memory_space<vmem>>, vector<32x32xf32>
    %cst_8 = arith.constant dense<0.000000e+00> : vector<16x32xf32>
    %9 = tpu.matmul %7, %8, %cst_8 {dimension_numbers = #tpu.dot_dimension_numbers<[1], [1], [0], [0], [0, 0, 1, 0], [], []>} : vector<16x32xf32>, vector<32x32xf32>, vector<16x32xf32> -> vector<16x32xf32>
    %c0_9 = arith.constant 0 : index
    %c0_10 = arith.constant 0 : index
    %10 = vector.load %arg4[%c0_9, %c0_10] : memref<1x32xf32, #tpu.memory_space<vmem>>, vector<1x32xf32>
    %11 = vector.broadcast %10 : vector<1x32xf32> to vector<16x32xf32>
    %12 = arith.addf %9, %11 : vector<16x32xf32>
    %c0_11 = arith.constant 0 : index
    %c0_12 = arith.constant 0 : index
    %13 = vector.load %arg5[%c0_11, %c0_12] : memref<16x32xf32, #tpu.memory_space<vmem>>, vector<16x32xf32>
    tpu.vector_store %arg5[%c0_11, %c0_12], %12 {strides = array<i32>} : memref<16x32xf32, #tpu.memory_space<vmem>>, vector<16x32xf32>,
    return
  }
}

module attributes {stable_mosaic.version = 11 : i64} {
  func.func @_fused_mlp_kernel(%arg0: i32, %arg1: memref<1x8x32xf32, #tpu.memory_space<vmem>>, %arg2: memref<1x32x32xf32, #tpu.memory_space<vmem>>, %arg3: memref<1x1x32xf32, #tpu.memory_space<vmem>>, %arg4: memref<1x16x32xf32, #tpu.memory_space<vmem>>, %arg5: memref<1x1x16xf32, #tpu.memory_space<vmem>>, %arg6: memref<1x8x16xf32, #tpu.memory_space<vmem>>) attributes {dimension_semantics = [#tpu.dimension_semantics<parallel>], iteration_bounds = array<i64: 4>, scalar_prefetch = 0 : i64, scratch_operands = 0 : i64, tpu.core_type = #tpu.core_type<tc>, window_params = [{transform_indices = @transform_0, window_bounds = array<i64: 1, 8, 32>}, {transform_indices = @transform_1, window_bounds = array<i64: 1, 32, 32>}, {transform_indices = @transform_2, window_bounds = array<i64: 1, 1, 32>}, {transform_indices = @transform_3, window_bounds = array<i64: 1, 16, 32>}, {transform_indices = @transform_4, window_bounds = array<i64: 1, 1, 16>}, {transform_indices = @transform_5, window_bounds = array<i64: 1, 8, 16>}]} {
    %c0 = arith.constant 0 : index
    %c0_0 = arith.constant 0 : index
    %c0_1 = arith.constant 0 : index
    %0 = vector.load %arg1[%c0, %c0_0, %c0_1] : memref<1x8x32xf32, #tpu.memory_space<vmem>>, vector<1x8x32xf32>
    %1 = vector.shape_cast %0 : vector<1x8x32xf32> to vector<8x32xf32>
    %c0_2 = arith.constant 0 : index
    %c0_3 = arith.constant 0 : index
    %c0_4 = arith.constant 0 : index
    %2 = vector.load %arg2[%c0_2, %c0_3, %c0_4] : memref<1x32x32xf32, #tpu.memory_space<vmem>>, vector<1x32x32xf32>
    %3 = vector.shape_cast %2 : vector<1x32x32xf32> to vector<32x32xf32>
    %cst = arith.constant dense<0.000000e+00> : vector<8x32xf32>
    %4 = tpu.matmul %1, %3, %cst {dimension_numbers = #tpu.dot_dimension_numbers<[1], [1], [0], [0], [0, 0, 1, 0], [], []>} : vector<8x32xf32>, vector<32x32xf32>, vector<8x32xf32> -> vector<8x32xf32>
    %c0_5 = arith.constant 0 : index
    %c0_6 = arith.constant 0 : index
    %c0_7 = arith.constant 0 : index
    %5 = vector.load %arg3[%c0_5, %c0_6, %c0_7] : memref<1x1x32xf32, #tpu.memory_space<vmem>>, vector<1x1x32xf32>
    %6 = vector.shape_cast %5 : vector<1x1x32xf32> to vector<1x32xf32>
    %7 = vector.broadcast %6 : vector<1x32xf32> to vector<8x32xf32>
    %8 = arith.addf %4, %7 : vector<8x32xf32>
    %cst_8 = arith.constant 0.000000e+00 : f32
    %9 = vector.broadcast %cst_8 : f32 to vector<8x32xf32>
    %10 = arith.maximumf %8, %9 : vector<8x32xf32>
    %c0_9 = arith.constant 0 : index
    %c0_10 = arith.constant 0 : index
    %c0_11 = arith.constant 0 : index
    %11 = vector.load %arg4[%c0_9, %c0_10, %c0_11] : memref<1x16x32xf32, #tpu.memory_space<vmem>>, vector<1x16x32xf32>
    %12 = vector.shape_cast %11 : vector<1x16x32xf32> to vector<16x32xf32>
    %cst_12 = arith.constant dense<0.000000e+00> : vector<8x16xf32>
    %13 = tpu.matmul %10, %12, %cst_12 {dimension_numbers = #tpu.dot_dimension_numbers<[1], [1], [0], [0], [0, 0, 1, 0], [], []>} : vector<8x32xf32>, vector<16x32xf32>, vector<8x16xf32> -> vector<8x16xf32>
    %c0_13 = arith.constant 0 : index
    %c0_14 = arith.constant 0 : index
    %c0_15 = arith.constant 0 : index
    %14 = vector.load %arg5[%c0_13, %c0_14, %c0_15] : memref<1x1x16xf32, #tpu.memory_space<vmem>>, vector<1x1x16xf32>
    %15 = vector.shape_cast %14 : vector<1x1x16xf32> to vector<1x16xf32>
    %16 = vector.broadcast %15 : vector<1x16xf32> to vector<8x16xf32>
    %17 = arith.addf %13, %16 : vector<8x16xf32>
    %c0_16 = arith.constant 0 : index
    %c0_17 = arith.constant 0 : index
    %c0_18 = arith.constant 0 : index
    %18 = vector.load %arg6[%c0_16, %c0_17, %c0_18] : memref<1x8x16xf32, #tpu.memory_space<vmem>>, vector<1x8x16xf32>
    %19 = vector.shape_cast %18 : vector<1x8x16xf32> to vector<8x16xf32>
    %20 = vector.shape_cast %17 : vector<8x16xf32> to vector<1x8x16xf32>
    tpu.vector_store %arg6[%c0_16, %c0_17, %c0_18], %20 {strides = array<i32>} : memref<1x8x16xf32, #tpu.memory_space<vmem>>, vector<1x8x16xf32>,
    return
  }
  func.func @transform_0(%arg0: i32) -> (i32, i32, i32) {
    %c2_i32 = arith.constant 2 : i32
    %c0_i32 = arith.constant 0 : i32
    %0 = arith.cmpi eq, %c2_i32, %c0_i32 : i32
    %c1_i32 = arith.constant 1 : i32
    %1 = arith.select %0, %c1_i32, %c2_i32 : i32
    %2 = arith.remsi %arg0, %1 : i32
    %c0_i32_0 = arith.constant 0 : i32
    %3 = arith.cmpi ne, %2, %c0_i32_0 : i32
    %c0_i32_1 = arith.constant 0 : i32
    %4 = arith.cmpi slt, %2, %c0_i32_1 : i32
    %c0_i32_2 = arith.constant 0 : i32
    %5 = arith.cmpi slt, %1, %c0_i32_2 : i32
    %6 = arith.xori %4, %5 : i1
    %7 = arith.andi %6, %3 : i1
    %8 = arith.addi %2, %1 : i32
    %9 = arith.select %7, %8, %2 : i32
    %c0_i32_3 = arith.constant 0 : i32
    %c0_i32_4 = arith.constant 0 : i32
    %c0_i32_5 = arith.constant 0 : i32
    return %9, %c0_i32_3, %c0_i32_4 : i32, i32, i32
  }
  func.func @transform_1(%arg0: i32) -> (i32, i32, i32) {
    %c2_i32 = arith.constant 2 : i32
    %0 = arith.minsi %arg0, %c2_i32 : i32
    %c0_i32 = arith.constant 0 : i32
    %c0_i32_0 = arith.constant 0 : i32
    %c0_i32_1 = arith.constant 0 : i32
    return %0, %c0_i32, %c0_i32_0 : i32, i32, i32
  }
  func.func @transform_2(%arg0: i32) -> (i32, i32, i32) {
    %c2_i32 = arith.constant 2 : i32
    %0 = arith.minsi %arg0, %c2_i32 : i32
    %c0_i32 = arith.constant 0 : i32
    %c0_i32_0 = arith.constant 0 : i32
    %c0_i32_1 = arith.constant 0 : i32
    return %0, %c0_i32, %c0_i32_0 : i32, i32, i32
  }
  func.func @transform_3(%arg0: i32) -> (i32, i32, i32) {
    %c2_i32 = arith.constant 2 : i32
    %0 = arith.minsi %arg0, %c2_i32 : i32
    %c0_i32 = arith.constant 0 : i32
    %c0_i32_0 = arith.constant 0 : i32
    %c0_i32_1 = arith.constant 0 : i32
    return %0, %c0_i32, %c0_i32_0 : i32, i32, i32
  }
  func.func @transform_4(%arg0: i32) -> (i32, i32, i32) {
    %c2_i32 = arith.constant 2 : i32
    %0 = arith.minsi %arg0, %c2_i32 : i32
    %c0_i32 = arith.constant 0 : i32
    %c0_i32_0 = arith.constant 0 : i32
    %c0_i32_1 = arith.constant 0 : i32
    return %0, %c0_i32, %c0_i32_0 : i32, i32, i32
  }
  func.func @transform_5(%arg0: i32) -> (i32, i32, i32) {
    %c0_i32 = arith.constant 0 : i32
    %c0_i32_0 = arith.constant 0 : i32
    %c0_i32_1 = arith.constant 0 : i32
    return %arg0, %c0_i32, %c0_i32_0 : i32, i32, i32
  }
}

</mosaic_0001>

<llo_original>
// kernel: model2_forward.3
$region0: #{model2_forward.3}
  #allocation0 [shape = 'u32[]', space=smem, size = 0x4, offset = 0x4, fixed_abs, tag = 'smem constant byte address 0x4 - core index']
  #allocation1 [shape = 'u32[144,128]{1,0:T(1,128)}', space=vmem, size = 0x12000, scoped, tag = 'internal scratch']
  %s0 = inlined_call_operand.vmem [shape: f32[16,32], index: 0, kind: input, shape index: {}]
  %s1 = inlined_call_operand.vmem [shape: f32[32,32], index: 1, kind: input, shape index: {}]
  %s2 = inlined_call_operand.vmem [shape: f32[1,32], index: 2, kind: input, shape index: {}]
  %s3 = inlined_call_operand.vmem [shape: f32[32,32], index: 3, kind: input, shape index: {}]
  %s4 = inlined_call_operand.vmem [shape: f32[1,32], index: 4, kind: input, shape index: {}]
  %s5 = inlined_call_operand.vmem [shape: f32[16,32], index: 5, kind: output, shape index: {}]
  %s6 = sld [smem:[#allocation0]]
  $region30: #{model2_forward.3} parent=0
    _
  %s8 = ssub.s32 1, %s6
  %s9 = scalar_select 0, %s8, %s6
  // Predicated region
  $region2: #{model2_forward.3} parent=0 // pred_check
    _
  $region3: #{model2_forward.3} parent=0 // pred_check_branch
    %11 = sbr.rel (0) target = $region5
  $region4: #{model2_forward.3} parent=0 // pred_region
    _
  $region5: #{model2_forward.3} parent=0 // pred_fallthru
    _
  // Predicated region
  $region6: #{model2_forward.3} parent=0 // pred_check
    _
  $region7: #{model2_forward.3} parent=0 // pred_check_branch
    %13 = sbr.rel (0) target = $region9
  $region8: #{model2_forward.3} parent=0 // pred_region
    _
  $region9: #{model2_forward.3} parent=0 // pred_fallthru
    _
  // Predicated region
  $region10: #{model2_forward.3} parent=0 // pred_check
    _
  $region11: #{model2_forward.3} parent=0 // pred_check_branch
    %15 = sbr.rel (0) target = $region13
  $region12: #{model2_forward.3} parent=0 // pred_region
    _
  $region13: #{model2_forward.3} parent=0 // pred_fallthru
    _
  // Predicated region
  $region14: #{model2_forward.3} parent=0 // pred_check
    _
  $region15: #{model2_forward.3} parent=0 // pred_check_branch
    %17 = sbr.rel (0) target = $region17
  $region16: #{model2_forward.3} parent=0 // pred_region
    _
  $region17: #{model2_forward.3} parent=0 // pred_fallthru
    _
  // Predicated region
  $region18: #{model2_forward.3} parent=0 // pred_check
    _
  $region19: #{model2_forward.3} parent=0 // pred_check_branch
    %19 = sbr.rel (0) target = $region21
  $region20: #{model2_forward.3} parent=0 // pred_region
    _
  $region21: #{model2_forward.3} parent=0 // pred_fallthru
    _
  %v20 = vld [vmem:[%s0] sm:$0xff]
  %v21 = vld [vmem:[%s0 + $0x8] sm:$0xff]
  %v22 = vld [vmem:[%s1] sm:$0xff]
  %v23 = vld [vmem:[%s1 + $0x8] sm:$0xff]
  %v24 = vld [vmem:[%s1 + $0x10] sm:$0xff]
  %v25 = vld [vmem:[%s1 + $0x18] sm:$0xff]
  %v26 = vld [vmem:[%s2] sm:$0x1]
  %v28 = vlaneseq
  %v29 = vshrl.u32 %v28, 7
  %v30 = vsub.s32 0, %v29
  %v31 = vrot.slane %v26, %v30
  %vm33 = vcmask 261120
  %v35 = vsel %vm33, %v20, 0
  %v38 = vsel %vm33, %v21, 0
  %v41 = vsel %vm33, %v22, 0
  %v44 = vsel %vm33, %v23, 0
  %v47 = vsel %vm33, %v24, 0
  %v50 = vsel %vm33, %v25, 0
  %52 = vmatprep.subr.mxu0 0.0
  %53 = vmatpush1.xpose.msra.mxu0 %v41
  %54 = vmatprep.subr.mxu0 0.0
  %55 = vmatpush1.xpose.msra.mxu0 %v44
  %56 = vmatprep.subr.mxu0 0.0
  %57 = vmatpush1.xpose.msra.mxu0 %v47
  %58 = vmatprep.subr.mxu0 0.0
  %59 = vmatpush1.xpose.msra.mxu0 %v50
  %60 = vmatprep.subr.mxu0 0.0
  %61 = vmatpush1.xpose.msra.mxu0 0.0
  %62 = vmatprep.subr.mxu0 0.0
  %63 = vmatpush1.xpose.msra.mxu0 0.0
  %64 = vmatprep.subr.mxu0 0.0
  %65 = vmatpush1.xpose.msra.mxu0 0.0
  %66 = vmatprep.subr.mxu0 0.0
  %67 = vmatpush1.xpose.msra.mxu0 0.0
  %68 = vmatprep.subr.mxu0 0.0
  %69 = vmatpush1.xpose.msra.mxu0 0.0
  %70 = vmatprep.subr.mxu0 0.0
  %71 = vmatpush1.xpose.msra.mxu0 0.0
  %72 = vmatprep.subr.mxu0 0.0
  %73 = vmatpush1.xpose.msra.mxu0 0.0
  %74 = vmatprep.subr.mxu0 0.0
  %75 = vmatpush1.xpose.msra.mxu0 0.0
  %76 = vmatprep.subr.mxu0 0.0
  %77 = vmatpush1.xpose.msra.mxu0 0.0
  %78 = vmatprep.subr.mxu0 0.0
  %79 = vmatpush1.xpose.msra.mxu0 0.0
  %80 = vmatprep.subr.mxu0 0.0
  %81 = vmatpush1.xpose.msra.mxu0 0.0
  %82 = vmatprep.subr.mxu0 0.0
  %83 = vmatpush1.xpose.msra.mxu0 0.0
  %84 = vmatprep.subr.mxu0 0.0
  %85 = vmatpush1.xpose.msra.mxu0 0.0
  %86 = vmatprep.subr.mxu0 0.0
  %87 = vmatpush1.xpose.msra.mxu0 0.0
  %88 = vmatprep.subr.mxu0 0.0
  %89 = vmatpush1.xpose.msra.mxu0 0.0
  %90 = vmatprep.subr.mxu0 0.0
  %91 = vmatpush1.xpose.msra.mxu0 0.0
  %92 = vmatprep.subr.mxu0 0.0
  %93 = vmatpush1.xpose.msra.mxu0 0.0
  %94 = vmatprep.subr.mxu0 0.0
  %95 = vmatpush1.xpose.msra.mxu0 0.0
  %96 = vmatprep.subr.mxu0 0.0
  %97 = vmatpush1.xpose.msra.mxu0 0.0
  %98 = vmatprep.subr.mxu0 0.0
  %99 = vmatpush1.xpose.msra.mxu0 0.0
  %100 = vmatprep.subr.mxu0 0.0
  %101 = vmatpush1.xpose.msra.mxu0 0.0
  %102 = vmatprep.subr.mxu0 0.0
  %103 = vmatpush1.xpose.msra.mxu0 0.0
  %104 = vmatprep.subr.mxu0 0.0
  %105 = vmatpush1.xpose.msra.mxu0 0.0
  %106 = vmatprep.subr.mxu0 0.0
  %107 = vmatpush1.xpose.msra.mxu0 0.0
  %108 = vmatprep.subr.mxu0 0.0
  %109 = vmatpush1.xpose.msra.mxu0 0.0
  %110 = vmatprep.subr.mxu0 0.0
  %111 = vmatpush1.xpose.msra.mxu0 0.0
  %112 = vmatprep.subr.mxu0 0.0
  %113 = vmatpush1.xpose.msra.mxu0 0.0
  %114 = vmatprep.subr.mxu0 0.0
  %115 = vmatpush1.xpose.msra.mxu0 0.0
  %116 = vmatprep.mubr.f32.mxu0 0.0
  %117 = vmatmul.mubr.f32.gmra.mrb[0].mxu0 %v35
  %v118 = vpop.f32.mrb[0].mxu0
  %v119 = vadd.f32 %v31, %v118
  %v120 = vpop.f32.mrb[0].mxu0
  %121 = vmatprep.mubr.f32.mxu0 0.0
  %122 = vmatmul.mubr.f32.gmra.mrb[0].mxu0 %v38
  %v123 = vpop.f32.mrb[0].mxu0
  %v124 = vadd.f32 %v31, %v123
  %v125 = vpop.f32.mrb[0].mxu0
  %126 = vdwg.mxu0
  %v127 = vmax.f32 %v119, 0.0
  %v128 = vmax.f32 %v124, 0.0
  %v129 = vld [vmem:[%s3] sm:$0xff]
  %v130 = vld [vmem:[%s3 + $0x8] sm:$0xff]
  %v131 = vld [vmem:[%s3 + $0x10] sm:$0xff]
  %v132 = vld [vmem:[%s3 + $0x18] sm:$0xff]
  %v133 = vld [vmem:[%s4] sm:$0x1]
  %v135 = vlaneseq
  %v136 = vshrl.u32 %v135, 7
  %v137 = vsub.s32 0, %v136
  %v138 = vrot.slane %v133, %v137
  %v141 = vsel %vm33, %v127, 0
  %v144 = vsel %vm33, %v128, 0
  %v147 = vsel %vm33, %v129, 0
  %v150 = vsel %vm33, %v130, 0
  %v153 = vsel %vm33, %v131, 0
  %v156 = vsel %vm33, %v132, 0
  %158 = vmatprep.subr.mxu0 0.0
  %159 = vmatpush1.xpose.msra.mxu0 %v147
  %160 = vmatprep.subr.mxu0 0.0
  %161 = vmatpush1.xpose.msra.mxu0 %v150
  %162 = vmatprep.subr.mxu0 0.0
  %163 = vmatpush1.xpose.msra.mxu0 %v153
  %164 = vmatprep.subr.mxu0 0.0
  %165 = vmatpush1.xpose.msra.mxu0 %v156
  %166 = vmatprep.subr.mxu0 0.0
  %167 = vmatpush1.xpose.msra.mxu0 0.0
  %168 = vmatprep.subr.mxu0 0.0
  %169 = vmatpush1.xpose.msra.mxu0 0.0
  %170 = vmatprep.subr.mxu0 0.0
  %171 = vmatpush1.xpose.msra.mxu0 0.0
  %172 = vmatprep.subr.mxu0 0.0
  %173 = vmatpush1.xpose.msra.mxu0 0.0
  %174 = vmatprep.subr.mxu0 0.0
  %175 = vmatpush1.xpose.msra.mxu0 0.0
  %176 = vmatprep.subr.mxu0 0.0
  %177 = vmatpush1.xpose.msra.mxu0 0.0
  %178 = vmatprep.subr.mxu0 0.0
  %179 = vmatpush1.xpose.msra.mxu0 0.0
  %180 = vmatprep.subr.mxu0 0.0
  %181 = vmatpush1.xpose.msra.mxu0 0.0
  %182 = vmatprep.subr.mxu0 0.0
  %183 = vmatpush1.xpose.msra.mxu0 0.0
  %184 = vmatprep.subr.mxu0 0.0
  %185 = vmatpush1.xpose.msra.mxu0 0.0
  %186 = vmatprep.subr.mxu0 0.0
  %187 = vmatpush1.xpose.msra.mxu0 0.0
  %188 = vmatprep.subr.mxu0 0.0
  %189 = vmatpush1.xpose.msra.mxu0 0.0
  %190 = vmatprep.subr.mxu0 0.0
  %191 = vmatpush1.xpose.msra.mxu0 0.0
  %192 = vmatprep.subr.mxu0 0.0
  %193 = vmatpush1.xpose.msra.mxu0 0.0
  %194 = vmatprep.subr.mxu0 0.0
  %195 = vmatpush1.xpose.msra.mxu0 0.0
  %196 = vmatprep.subr.mxu0 0.0
  %197 = vmatpush1.xpose.msra.mxu0 0.0
  %198 = vmatprep.subr.mxu0 0.0
  %199 = vmatpush1.xpose.msra.mxu0 0.0
  %200 = vmatprep.subr.mxu0 0.0
  %201 = vmatpush1.xpose.msra.mxu0 0.0
  %202 = vmatprep.subr.mxu0 0.0
  %203 = vmatpush1.xpose.msra.mxu0 0.0
  %204 = vmatprep.subr.mxu0 0.0
  %205 = vmatpush1.xpose.msra.mxu0 0.0
  %206 = vmatprep.subr.mxu0 0.0
  %207 = vmatpush1.xpose.msra.mxu0 0.0
  %208 = vmatprep.subr.mxu0 0.0
  %209 = vmatpush1.xpose.msra.mxu0 0.0
  %210 = vmatprep.subr.mxu0 0.0
  %211 = vmatpush1.xpose.msra.mxu0 0.0
  %212 = vmatprep.subr.mxu0 0.0
  %213 = vmatpush1.xpose.msra.mxu0 0.0
  %214 = vmatprep.subr.mxu0 0.0
  %215 = vmatpush1.xpose.msra.mxu0 0.0
  %216 = vmatprep.subr.mxu0 0.0
  %217 = vmatpush1.xpose.msra.mxu0 0.0
  %218 = vmatprep.subr.mxu0 0.0
  %219 = vmatpush1.xpose.msra.mxu0 0.0
  %220 = vmatprep.subr.mxu0 0.0
  %221 = vmatpush1.xpose.msra.mxu0 0.0
  %222 = vmatprep.mubr.f32.mxu0 0.0
  %223 = vmatmul.mubr.f32.gmra.mrb[0].mxu0 %v141
  %v224 = vpop.f32.mrb[0].mxu0
  %v225 = vadd.f32 %v138, %v224
  %v226 = vpop.f32.mrb[0].mxu0
  %227 = vmatprep.mubr.f32.mxu0 0.0
  %228 = vmatmul.mubr.f32.gmra.mrb[0].mxu0 %v144
  %v229 = vpop.f32.mrb[0].mxu0
  %v230 = vadd.f32 %v138, %v229
  %v231 = vpop.f32.mrb[0].mxu0
  %232 = vdwg.mxu0
  %233 = vst.msk [vmem:[%s5] sm:$0xff] %vm33, %v225
  %234 = vst.msk [vmem:[%s5 + $0x8] sm:$0xff] %vm33, %v230
  // Predicated region
  $region22: #{model2_forward.3} parent=0 // pred_check
    _
  $region23: #{model2_forward.3} parent=0 // pred_check_branch
    %236 = sbr.rel (0) target = $region25
  $region24: #{model2_forward.3} parent=0 // pred_region
    _
  $region25: #{model2_forward.3} parent=0 // pred_fallthru
    _
  // Predicated region
  $region26: #{model2_forward.3} parent=0 // pred_check
    _
  $region27: #{model2_forward.3} parent=0 // pred_check_branch
    %238 = sbr.rel (0) target = $region29
  $region28: #{model2_forward.3} parent=0 // pred_region
    _
  $region29: #{model2_forward.3} parent=0 // pred_fallthru
    _

// kernel: model2_forward.2
$region0: #{model2_forward.2}
  #allocation0 [shape = 'u32[]', space=smem, size = 0x4, offset = 0x4, fixed_abs, tag = 'smem constant byte address 0x4 - core index']
  #allocation1 [shape = 'u32[144,128]{1,0:T(1,128)}', space=vmem, size = 0x12000, scoped, tag = 'internal scratch']
  %s0 = inlined_call_operand.vmem [shape: f32[2,8,32], index: 0, kind: input, shape index: {}]
  %s1 = inlined_call_operand.hbm [shape: f32[3,32,32], index: 1, kind: input, shape index: {}]
  %s2 = inlined_call_operand.vmem [shape: f32[3,1,32], index: 2, kind: input, shape index: {}]
  %s3 = inlined_call_operand.vmem [shape: f32[3,16,32], index: 3, kind: input, shape index: {}]
  %s4 = inlined_call_operand.vmem [shape: f32[3,1,16], index: 4, kind: input, shape index: {}]
  %s5 = inlined_call_operand.vmem [shape: f32[4,8,16], index: 5, kind: output, shape index: {}]
  %s6 = sld [smem:[#allocation0]]
  $region57: #{model2_forward.2} parent=0
    _
  %s8 = ssub.s32 1, %s6
  %s9 = scalar_select 0, %s8, %s6
  $region1: #{model2_forward.2} parent=0
    #allocation2 [shape = 'u8[32768]{0}', space=vmem, size = 0x8000, scoped, tag = 'input window, operand 1']
    #allocation3 [shape = 's32[2]{0}', space=sflag, size = 0x8, scoped, tag = 'scoped memory for model2_forward.2']
    %10 = vsyncpa [#allocation3], 0
    %s11 = scalar_lea.sflag [#allocation3], 1
    %12 = vsyncpa %s11, 0
    loop: start=0, step=1, limit=6
    $region2: #{model2_forward.2} parent=1 // loop_pre_header
      _
    $region3: #{model2_forward.2} parent=1 // loop_header
      %s14 = sphi 0, %s18
      %p15 = scmp.ge.s32.totalorder %s14, 6
      %s48 = sphi 0, %s50
      %s51 = sphi 0, %s48
      %s52 = sphi 0, %s51
      %s68 = sphi 0, %s52
      %s78 = sphi 0, %s80
      %s81 = sphi 0, %s78
      %s82 = sphi 0, %s81
      %s98 = sphi 0, %s82
      %s108 = sphi 0, %s110
      %s111 = sphi 0, %s108
      %s112 = sphi 0, %s111
      %s128 = sphi 0, %s112
      %s138 = sphi 0, %s140
      %s141 = sphi 0, %s138
      %s142 = sphi 0, %s141
      %s158 = sphi 0, %s142
      %s168 = sphi 0, %s170
      %s171 = sphi 0, %s168
      %s172 = sphi 0, %s171
      %s188 = sphi 0, %s172
      %s194 = sphi 0, %s196
      %s197 = sphi 0, %s194
      %s198 = sphi 0, %s197
      %s214 = sphi 0, %s198
    $region4: #{model2_forward.2} parent=1 // loop_header_branch
      %17 = sbr.rel (%p15) target = $region8
    $region5: #{model2_forward.2} parent=1 // loop_body
      %s19 = ssub.s32 %s14, 1
      %s20 = ssub.s32 %s14, 2
      %s21 = sadd.s32 %s14, 1
      %p22 = scmp.lt.s32.totalorder %s14, 0
      %s23 = ssub.s32 0, %s14
      %s24 = scalar_select %p22, %s23, %s14
      %s25 = sand.u32 %s24, 1
      %s26 = ssub.s32 0, %s25
      %s27 = scalar_select %p22, %s26, %s25
      %p28 = scmp.ne.s32.totalorder %s27, 0
      %p29 = scmp.lt.s32.totalorder %s27, 0
      %p30 = pnand %p29, %p28
      %p31 = pneg %p30
      %s32 = sadd.s32 %s27, 2
      %s33 = scalar_select %p31, %s32, %s27
      %p34 = scmp.lt.s32.totalorder %s21, 0
      %s35 = ssub.s32 0, %s21
      %s36 = scalar_select %p34, %s35, %s21
      %s37 = sand.u32 %s36, 1
      %s38 = ssub.s32 0, %s37
      %s39 = scalar_select %p34, %s38, %s37
      %p40 = scmp.ne.s32.totalorder %s39, 0
      %p41 = scmp.lt.s32.totalorder %s39, 0
      %p42 = pnand %p41, %p40
      %p43 = pneg %p42
      %s44 = sadd.s32 %s39, 2
      %s45 = scalar_select %p43, %s44, %s39
      %s46 = ssub.s32 %s33, %s45
      %p47 = scmp.eq.s32.totalorder %s46, 0
      %s49 = sadd.s32 %s48, 1
      %s50 = scalar_select %p47, %s48, %s49
      %p53 = pneg %p47
      %p54 = scmp.eq.s32.totalorder %s14, 3
      %p55 = por %p53, %p54
      %p56 = scmp.ne.s32.totalorder %s48, %s51
      %p57 = scmp.eq.s32.totalorder %s14, 0
      %p58 = por %p56, %p57
      %p59 = scmp.ne.s32.totalorder %s48, %s51
      %p60 = scmp.eq.s32.totalorder %s19, 3
      %p61 = por %p59, %p60
      %p62 = scmp.ne.s32.totalorder %s51, %s52
      %p63 = scmp.eq.s32.totalorder %s19, 0
      %p64 = por %p62, %p63
      %p65 = scmp.ne.s32.totalorder %s51, %s52
      %p66 = scmp.eq.s32.totalorder %s20, 3
      %p67 = por %p65, %p66
      %p69 = scmp.ne.s32.totalorder %s52, %s68
      %p70 = scmp.eq.s32.totalorder %s20, 0
      %p71 = por %p69, %p70
      %p72 = scmp.lt.s32.totalorder %s14, 2
      %s73 = scalar_select %p72, %s14, 2
      %p74 = scmp.lt.s32.totalorder %s21, 2
      %s75 = scalar_select %p74, %s21, 2
      %s76 = ssub.s32 %s73, %s75
      %p77 = scmp.eq.s32.totalorder %s76, 0
      %s79 = sadd.s32 %s78, 1
      %s80 = scalar_select %p77, %s78, %s79
      %p83 = pneg %p77
      %p84 = scmp.eq.s32.totalorder %s14, 3
      %p85 = por %p83, %p84
      %p86 = scmp.ne.s32.totalorder %s78, %s81
      %p87 = scmp.eq.s32.totalorder %s14, 0
      %p88 = por %p86, %p87
      %p89 = scmp.ne.s32.totalorder %s78, %s81
      %p90 = scmp.eq.s32.totalorder %s19, 3
      %p91 = por %p89, %p90
      %p92 = scmp.ne.s32.totalorder %s81, %s82
      %p93 = scmp.eq.s32.totalorder %s19, 0
      %p94 = por %p92, %p93
      %p95 = scmp.ne.s32.totalorder %s81, %s82
      %p96 = scmp.eq.s32.totalorder %s20, 3
      %p97 = por %p95, %p96
      %p99 = scmp.ne.s32.totalorder %s82, %s98
      %p100 = scmp.eq.s32.totalorder %s20, 0
      %p101 = por %p99, %p100
      %p102 = scmp.lt.s32.totalorder %s14, 2
      %s103 = scalar_select %p102, %s14, 2
      %p104 = scmp.lt.s32.totalorder %s21, 2
      %s105 = scalar_select %p104, %s21, 2
      %s106 = ssub.s32 %s103, %s105
      %p107 = scmp.eq.s32.totalorder %s106, 0
      %s109 = sadd.s32 %s108, 1
      %s110 = scalar_select %p107, %s108, %s109
      %p113 = pneg %p107
      %p114 = scmp.eq.s32.totalorder %s14, 3
      %p115 = por %p113, %p114
      %p116 = scmp.ne.s32.totalorder %s108, %s111
      %p117 = scmp.eq.s32.totalorder %s14, 0
      %p118 = por %p116, %p117
      %p119 = scmp.ne.s32.totalorder %s108, %s111
      %p120 = scmp.eq.s32.totalorder %s19, 3
      %p121 = por %p119, %p120
      %p122 = scmp.ne.s32.totalorder %s111, %s112
      %p123 = scmp.eq.s32.totalorder %s19, 0
      %p124 = por %p122, %p123
      %p125 = scmp.ne.s32.totalorder %s111, %s112
      %p126 = scmp.eq.s32.totalorder %s20, 3
      %p127 = por %p125, %p126
      %p129 = scmp.ne.s32.totalorder %s112, %s128
      %p130 = scmp.eq.s32.totalorder %s20, 0
      %p131 = por %p129, %p130
      %p132 = scmp.lt.s32.totalorder %s14, 2
      %s133 = scalar_select %p132, %s14, 2
      %p134 = scmp.lt.s32.totalorder %s21, 2
      %s135 = scalar_select %p134, %s21, 2
      %s136 = ssub.s32 %s133, %s135
      %p137 = scmp.eq.s32.totalorder %s136, 0
      %s139 = sadd.s32 %s138, 1
      %s140 = scalar_select %p137, %s138, %s139
      %p143 = pneg %p137
      %p144 = scmp.eq.s32.totalorder %s14, 3
      %p145 = por %p143, %p144
      %p146 = scmp.ne.s32.totalorder %s138, %s141
      %p147 = scmp.eq.s32.totalorder %s14, 0
      %p148 = por %p146, %p147
      %p149 = scmp.ne.s32.totalorder %s138, %s141
      %p150 = scmp.eq.s32.totalorder %s19, 3
      %p151 = por %p149, %p150
      %p152 = scmp.ne.s32.totalorder %s141, %s142
      %p153 = scmp.eq.s32.totalorder %s19, 0
      %p154 = por %p152, %p153
      %p155 = scmp.ne.s32.totalorder %s141, %s142
      %p156 = scmp.eq.s32.totalorder %s20, 3
      %p157 = por %p155, %p156
      %p159 = scmp.ne.s32.totalorder %s142, %s158
      %p160 = scmp.eq.s32.totalorder %s20, 0
      %p161 = por %p159, %p160
      %p162 = scmp.lt.s32.totalorder %s14, 2
      %s163 = scalar_select %p162, %s14, 2
      %p164 = scmp.lt.s32.totalorder %s21, 2
      %s165 = scalar_select %p164, %s21, 2
      %s166 = ssub.s32 %s163, %s165
      %p167 = scmp.eq.s32.totalorder %s166, 0
      %s169 = sadd.s32 %s168, 1
      %s170 = scalar_select %p167, %s168, %s169
      %p173 = pneg %p167
      %p174 = scmp.eq.s32.totalorder %s14, 3
      %p175 = por %p173, %p174
      %p176 = scmp.ne.s32.totalorder %s168, %s171
      %p177 = scmp.eq.s32.totalorder %s14, 0
      %p178 = por %p176, %p177
      %p179 = scmp.ne.s32.totalorder %s168, %s171
      %p180 = scmp.eq.s32.totalorder %s19, 3
      %p181 = por %p179, %p180
      %p182 = scmp.ne.s32.totalorder %s171, %s172
      %p183 = scmp.eq.s32.totalorder %s19, 0
      %p184 = por %p182, %p183
      %p185 = scmp.ne.s32.totalorder %s171, %s172
      %p186 = scmp.eq.s32.totalorder %s20, 3
      %p187 = por %p185, %p186
      %p189 = scmp.ne.s32.totalorder %s172, %s188
      %p190 = scmp.eq.s32.totalorder %s20, 0
      %p191 = por %p189, %p190
      %s192 = ssub.s32 %s14, %s21
      %p193 = scmp.eq.s32.totalorder %s192, 0
      %s195 = sadd.s32 %s194, 1
      %s196 = scalar_select %p193, %s194, %s195
      %p199 = pneg %p193
      %p200 = scmp.eq.s32.totalorder %s14, 3
      %p201 = por %p199, %p200
      %p202 = scmp.ne.s32.totalorder %s194, %s197
      %p203 = scmp.eq.s32.totalorder %s14, 0
      %p204 = por %p202, %p203
      %p205 = scmp.ne.s32.totalorder %s194, %s197
      %p206 = scmp.eq.s32.totalorder %s19, 3
      %p207 = por %p205, %p206
      %p208 = scmp.ne.s32.totalorder %s197, %s198
      %p209 = scmp.eq.s32.totalorder %s19, 0
      %p210 = por %p208, %p209
      %p211 = scmp.ne.s32.totalorder %s197, %s198
      %p212 = scmp.eq.s32.totalorder %s20, 3
      %p213 = por %p211, %p212
      %p215 = scmp.ne.s32.totalorder %s198, %s214
      %p216 = scmp.eq.s32.totalorder %s20, 0
      %p217 = por %p215, %p216
      %p218 = scmp.le.s32.totalorder 1, %s14
      %p219 = scmp.lt.s32.totalorder %s14, 5
      %p220 = pnand %p218, %p219
      %p221 = pneg %p220
      // Predicated region
      $region9: #{model2_forward.2} parent=5 // pred_check
        _
      $region10: #{model2_forward.2} parent=5 // pred_check_branch
        %223 = sbr.rel (%p220) target = $region12
      $region11: #{model2_forward.2} parent=5 // pred_region
        %s224 = ssub.s32 %s14, 1
      $region12: #{model2_forward.2} parent=5 // pred_fallthru
        _
      %p225 = scmp.lt.s32.totalorder %s14, 4
      // Predicated region
      $region13: #{model2_forward.2} parent=5 // pred_check
        %p226 = pneg %p225
      $region14: #{model2_forward.2} parent=5 // pred_check_branch
        %228 = sbr.rel (%p226) target = $region16
      $region15: #{model2_forward.2} parent=5 // pred_region
        // Predicated region
        $region17: #{model2_forward.2} parent=15 // pred_check
          %p229 = pneg %p58
        $region18: #{model2_forward.2} parent=15 // pred_check_branch
          %231 = sbr.rel (%p229) target = $region20
        $region19: #{model2_forward.2} parent=15 // pred_region
          %p232 = scmp.lt.s32.totalorder %s14, 0
          %s233 = ssub.s32 0, %s14
          %s234 = scalar_select %p232, %s233, %s14
          %s235 = sand.u32 %s234, 1
          %s236 = ssub.s32 0, %s235
          %s237 = scalar_select %p232, %s236, %s235
          %p238 = scmp.ne.s32.totalorder %s237, 0
          %p239 = scmp.lt.s32.totalorder %s237, 0
          %p240 = pnand %p239, %p238
          %p241 = pneg %p240
          %s242 = sadd.s32 %s237, 2
          %s243 = scalar_select %p241, %s242, %s237
          %p244 = scmp.lt.s32.totalorder %s243, 1
          %s245 = scalar_select %p244, %s243, 1
          %s246 = smul.addr %s245, 8
          %s247 = scalar_lea.vmem %s0, %s246
          %p248 = scmp.lt.s32.totalorder %s14, 0
          %s249 = ssub.s32 0, %s14
          %s250 = scalar_select %p248, %s249, %s14
          %s251 = sand.u32 %s250, 1
          %s252 = ssub.s32 0, %s251
          %s253 = scalar_select %p248, %s252, %s251
          %p254 = scmp.ne.s32.totalorder %s253, 0
          %p255 = scmp.lt.s32.totalorder %s253, 0
          %p256 = pnand %p255, %p254
          %p257 = pneg %p256
          %s258 = sadd.s32 %s253, 2
          %s259 = scalar_select %p257, %s258, %s253
        $region20: #{model2_forward.2} parent=15 // pred_fallthru
          _
        // Predicated region
        $region21: #{model2_forward.2} parent=15 // pred_check
          %p260 = pneg %p88
        $region22: #{model2_forward.2} parent=15 // pred_check_branch
          %262 = sbr.rel (%p260) target = $region24
        $region23: #{model2_forward.2} parent=15 // pred_region
          %s263 = sand.u32 %s78, 1
          %s264 = scalar_lea.sflag [#allocation3], %s263
          %s265 = sand.u32 %s78, 1
          %s266 = smul.addr %s265, 32
          %s267 = scalar_lea.vmem [#allocation2], %s266
          %p268 = scmp.lt.s32.totalorder %s14, 2
          %s269 = scalar_select %p268, %s14, 2
          %s271 = ssub.s32 512, 512
          %272 = vsyncadd %s264, %s271
          %s273 = smul.addr %s269, 4
          %s274 = smul.addr %s273, 128
          %s275 = scalar_lea.hbm %s1, %s274
          %s276 = sshll.u32 %s267, 4
          %s277 = int_to_ptr.vmem [resolvable:$true] %s276
          %282 = dma.hbm_to_vmem [thread:$0]  %s275, 512, %s277, %s264, 128, 128, 8
        $region24: #{model2_forward.2} parent=15 // pred_fallthru
          _
        // Predicated region
        $region25: #{model2_forward.2} parent=15 // pred_check
          %p283 = pneg %p118
        $region26: #{model2_forward.2} parent=15 // pred_check_branch
          %285 = sbr.rel (%p283) target = $region28
        $region27: #{model2_forward.2} parent=15 // pred_region
          %p286 = scmp.lt.s32.totalorder %s14, 2
          %s287 = scalar_select %p286, %s14, 2
          %p288 = scmp.lt.s32.totalorder %s287, 2
          %s289 = scalar_select %p288, %s287, 2
          %s290 = scalar_lea.vmem %s2, %s289
          %p291 = scmp.lt.s32.totalorder %s14, 2
          %s292 = scalar_select %p291, %s14, 2
        $region28: #{model2_forward.2} parent=15 // pred_fallthru
          _
        // Predicated region
        $region29: #{model2_forward.2} parent=15 // pred_check
          %p293 = pneg %p148
        $region30: #{model2_forward.2} parent=15 // pred_check_branch
          %295 = sbr.rel (%p293) target = $region32
        $region31: #{model2_forward.2} parent=15 // pred_region
          %p296 = scmp.lt.s32.totalorder %s14, 2
          %s297 = scalar_select %p296, %s14, 2
          %p298 = scmp.lt.s32.totalorder %s297, 2
          %s299 = scalar_select %p298, %s297, 2
          %s300 = smul.addr %s299, 2
          %s301 = smul.addr %s300, 8
          %s302 = scalar_lea.vmem %s3, %s301
          %p303 = scmp.lt.s32.totalorder %s14, 2
          %s304 = scalar_select %p303, %s14, 2
        $region32: #{model2_forward.2} parent=15 // pred_fallthru
          _
        // Predicated region
        $region33: #{model2_forward.2} parent=15 // pred_check
          %p305 = pneg %p178
        $region34: #{model2_forward.2} parent=15 // pred_check_branch
          %307 = sbr.rel (%p305) target = $region36
        $region35: #{model2_forward.2} parent=15 // pred_region
          %p308 = scmp.lt.s32.totalorder %s14, 2
          %s309 = scalar_select %p308, %s14, 2
          %p310 = scmp.lt.s32.totalorder %s309, 2
          %s311 = scalar_select %p310, %s309, 2
          %s312 = scalar_lea.vmem %s4, %s311
          %p313 = scmp.lt.s32.totalorder %s14, 2
          %s314 = scalar_select %p313, %s14, 2
        $region36: #{model2_forward.2} parent=15 // pred_fallthru
          _
      $region16: #{model2_forward.2} parent=5 // pred_fallthru
        _
      %p315 = scmp.le.s32.totalorder 1, %s14
      %p316 = scmp.lt.s32.totalorder %s14, 5
      %p317 = pnand %p315, %p316
      %p318 = pneg %p317
      // Predicated region
      $region37: #{model2_forward.2} parent=5 // pred_check
        _
      $region38: #{model2_forward.2} parent=5 // pred_check_branch
        %320 = sbr.rel (%p317) target = $region40
      $region39: #{model2_forward.2} parent=5 // pred_region
        %s321 = ssub.s32 %s14, 1
        %s322 = sand.u32 %s81, 1
        %s323 = scalar_lea.sflag [#allocation3], %s322
        %s324 = sand.u32 %s81, 1
        %s325 = smul.addr %s324, 32
        %s326 = scalar_lea.vmem [#allocation2], %s325
        // Predicated region
        $region41: #{model2_forward.2} parent=39 // pred_check
          %p327 = pneg %p94
        $region42: #{model2_forward.2} parent=39 // pred_check_branch
          %329 = sbr.rel (%p327) target = $region44
        $region43: #{model2_forward.2} parent=39 // pred_region
          %330 = dma.done %s323, 512
        $region44: #{model2_forward.2} parent=39 // pred_fallthru
          _
        %p331 = scmp.lt.s32.totalorder %s19, 0
        %s332 = ssub.s32 0, %s19
        %s333 = scalar_select %p331, %s332, %s19
        %s334 = sand.u32 %s333, 1
        %s335 = ssub.s32 0, %s334
        %s336 = scalar_select %p331, %s335, %s334
        %p337 = scmp.ne.s32.totalorder %s336, 0
        %p338 = scmp.lt.s32.totalorder %s336, 0
        %p339 = pnand %p338, %p337
        %p340 = pneg %p339
        %s341 = sadd.s32 %s336, 2
        %s342 = scalar_select %p340, %s341, %s336
        %p343 = scmp.lt.s32.totalorder %s342, 1
        %s344 = scalar_select %p343, %s342, 1
        %s345 = smul.addr %s344, 8
        %s346 = scalar_lea.vmem %s0, %s345
        %p347 = pneg %p64
        %p348 = pneg %p61
        %s349 = sand.u32 %s81, 1
        %s350 = scalar_lea.sflag [#allocation3], %s349
        %s351 = sand.u32 %s81, 1
        %s352 = smul.addr %s351, 32
        %s353 = scalar_lea.vmem [#allocation2], %s352
        %p354 = pneg %p94
        %p355 = pneg %p91
        %p356 = scmp.lt.s32.totalorder %s19, 2
        %s357 = scalar_select %p356, %s19, 2
        %p358 = scmp.lt.s32.totalorder %s357, 2
        %s359 = scalar_select %p358, %s357, 2
        %s360 = scalar_lea.vmem %s2, %s359
        %p361 = pneg %p124
        %p362 = pneg %p121
        %p363 = scmp.lt.s32.totalorder %s19, 2
        %s364 = scalar_select %p363, %s19, 2
        %p365 = scmp.lt.s32.totalorder %s364, 2
        %s366 = scalar_select %p365, %s364, 2
        %s367 = smul.addr %s366, 2
        %s368 = smul.addr %s367, 8
        %s369 = scalar_lea.vmem %s3, %s368
        %p370 = pneg %p154
        %p371 = pneg %p151
        %p372 = scmp.lt.s32.totalorder %s19, 2
        %s373 = scalar_select %p372, %s19, 2
        %p374 = scmp.lt.s32.totalorder %s373, 2
        %s375 = scalar_select %p374, %s373, 2
        %s376 = scalar_lea.vmem %s4, %s375
        %p377 = pneg %p184
        %p378 = pneg %p181
        %p379 = pneg %p210
        %p380 = pneg %p207
        %p381 = scmp.lt.s32.totalorder %s19, 3
        %s382 = scalar_select %p381, %s19, 3
        %s383 = smul.addr %s382, 8
        %s384 = scalar_lea.vmem %s5, %s383
        %p385 = scmp.lt.s32.totalorder %s19, 0
        %s386 = ssub.s32 0, %s19
        %s387 = scalar_select %p385, %s386, %s19
        %s388 = sand.u32 %s387, 1
        %s389 = ssub.s32 0, %s388
        %s390 = scalar_select %p385, %s389, %s388
        %p391 = scmp.ne.s32.totalorder %s390, 0
        %p392 = scmp.lt.s32.totalorder %s390, 0
        %p393 = pnand %p392, %p391
        %p394 = pneg %p393
        %s395 = sadd.s32 %s390, 2
        %s396 = scalar_select %p394, %s395, %s390
        %p397 = scmp.lt.s32.totalorder %s396, 1
        %s398 = scalar_select %p397, %s396, 1
        %s399 = smul.addr %s398, 8
        %s400 = scalar_lea.vmem %s0, %s399
        %p401 = scmp.lt.s32.totalorder %s19, 0
        %s402 = ssub.s32 0, %s19
        %s403 = scalar_select %p401, %s402, %s19
        %s404 = sand.u32 %s403, 1
        %s405 = ssub.s32 0, %s404
        %s406 = scalar_select %p401, %s405, %s404
        %p407 = scmp.ne.s32.totalorder %s406, 0
        %p408 = scmp.lt.s32.totalorder %s406, 0
        %p409 = pnand %p408, %p407
        %p410 = pneg %p409
        %s411 = sadd.s32 %s406, 2
        %s412 = scalar_select %p410, %s411, %s406
        %p413 = scmp.lt.s32.totalorder %s19, 2
        %s414 = scalar_select %p413, %s19, 2
        %p415 = scmp.lt.s32.totalorder %s19, 2
        %s416 = scalar_select %p415, %s19, 2
        %p417 = scmp.lt.s32.totalorder %s416, 2
        %s418 = scalar_select %p417, %s416, 2
        %s419 = scalar_lea.vmem %s2, %s418
        %p420 = scmp.lt.s32.totalorder %s19, 2
        %s421 = scalar_select %p420, %s19, 2
        %p422 = scmp.lt.s32.totalorder %s19, 2
        %s423 = scalar_select %p422, %s19, 2
        %p424 = scmp.lt.s32.totalorder %s423, 2
        %s425 = scalar_select %p424, %s423, 2
        %s426 = smul.addr %s425, 2
        %s427 = smul.addr %s426, 8
        %s428 = scalar_lea.vmem %s3, %s427
        %p429 = scmp.lt.s32.totalorder %s19, 2
        %s430 = scalar_select %p429, %s19, 2
        %p431 = scmp.lt.s32.totalorder %s19, 2
        %s432 = scalar_select %p431, %s19, 2
        %p433 = scmp.lt.s32.totalorder %s432, 2
        %s434 = scalar_select %p433, %s432, 2
        %s435 = scalar_lea.vmem %s4, %s434
        %p436 = scmp.lt.s32.totalorder %s19, 2
        %s437 = scalar_select %p436, %s19, 2
        %p438 = scmp.lt.s32.totalorder %s19, 3
        %s439 = scalar_select %p438, %s19, 3
        %s440 = smul.addr %s439, 8
        %s441 = scalar_lea.vmem %s5, %s440
        %v442 = vld [vmem:[%s400] sm:$0xff]
        %v443 = vld [vmem:[%s326] sm:$0xff]
        %v444 = vld [vmem:[%s326 + $0x8] sm:$0xff]
        %v445 = vld [vmem:[%s326 + $0x10] sm:$0xff]
        %v446 = vld [vmem:[%s326 + $0x18] sm:$0xff]
        %v447 = vld [vmem:[%s419] sm:$0x1]
        %v449 = vlaneseq
        %v450 = vshrl.u32 %v449, 7
        %v451 = vsub.s32 0, %v450
        %v452 = vrot.slane %v447, %v451
        %vm454 = vcmask 261120
        %v456 = vsel %vm454, %v442, 0
        %v459 = vsel %vm454, %v443, 0
        %v462 = vsel %vm454, %v444, 0
        %v465 = vsel %vm454, %v445, 0
        %v468 = vsel %vm454, %v446, 0
        %470 = vmatprep.subr.mxu0 0.0
        %471 = vmatpush1.xpose.msra.mxu0 %v459
        %472 = vmatprep.subr.mxu0 0.0
        %473 = vmatpush1.xpose.msra.mxu0 %v462
        %474 = vmatprep.subr.mxu0 0.0
        %475 = vmatpush1.xpose.msra.mxu0 %v465
        %476 = vmatprep.subr.mxu0 0.0
        %477 = vmatpush1.xpose.msra.mxu0 %v468
        %478 = vmatprep.subr.mxu0 0.0
        %479 = vmatpush1.xpose.msra.mxu0 0.0
        %480 = vmatprep.subr.mxu0 0.0
        %481 = vmatpush1.xpose.msra.mxu0 0.0
        %482 = vmatprep.subr.mxu0 0.0
        %483 = vmatpush1.xpose.msra.mxu0 0.0
        %484 = vmatprep.subr.mxu0 0.0
        %485 = vmatpush1.xpose.msra.mxu0 0.0
        %486 = vmatprep.subr.mxu0 0.0
        %487 = vmatpush1.xpose.msra.mxu0 0.0
        %488 = vmatprep.subr.mxu0 0.0
        %489 = vmatpush1.xpose.msra.mxu0 0.0
        %490 = vmatprep.subr.mxu0 0.0
        %491 = vmatpush1.xpose.msra.mxu0 0.0
        %492 = vmatprep.subr.mxu0 0.0
        %493 = vmatpush1.xpose.msra.mxu0 0.0
        %494 = vmatprep.subr.mxu0 0.0
        %495 = vmatpush1.xpose.msra.mxu0 0.0
        %496 = vmatprep.subr.mxu0 0.0
        %497 = vmatpush1.xpose.msra.mxu0 0.0
        %498 = vmatprep.subr.mxu0 0.0
        %499 = vmatpush1.xpose.msra.mxu0 0.0
        %500 = vmatprep.subr.mxu0 0.0
        %501 = vmatpush1.xpose.msra.mxu0 0.0
        %502 = vmatprep.subr.mxu0 0.0
        %503 = vmatpush1.xpose.msra.mxu0 0.0
        %504 = vmatprep.subr.mxu0 0.0
        %505 = vmatpush1.xpose.msra.mxu0 0.0
        %506 = vmatprep.subr.mxu0 0.0
        %507 = vmatpush1.xpose.msra.mxu0 0.0
        %508 = vmatprep.subr.mxu0 0.0
        %509 = vmatpush1.xpose.msra.mxu0 0.0
        %510 = vmatprep.subr.mxu0 0.0
        %511 = vmatpush1.xpose.msra.mxu0 0.0
        %512 = vmatprep.subr.mxu0 0.0
        %513 = vmatpush1.xpose.msra.mxu0 0.0
        %514 = vmatprep.subr.mxu0 0.0
        %515 = vmatpush1.xpose.msra.mxu0 0.0
        %516 = vmatprep.subr.mxu0 0.0
        %517 = vmatpush1.xpose.msra.mxu0 0.0
        %518 = vmatprep.subr.mxu0 0.0
        %519 = vmatpush1.xpose.msra.mxu0 0.0
        %520 = vmatprep.subr.mxu0 0.0
        %521 = vmatpush1.xpose.msra.mxu0 0.0
        %522 = vmatprep.subr.mxu0 0.0
        %523 = vmatpush1.xpose.msra.mxu0 0.0
        %524 = vmatprep.subr.mxu0 0.0
        %525 = vmatpush1.xpose.msra.mxu0 0.0
        %526 = vmatprep.subr.mxu0 0.0
        %527 = vmatpush1.xpose.msra.mxu0 0.0
        %528 = vmatprep.subr.mxu0 0.0
        %529 = vmatpush1.xpose.msra.mxu0 0.0
        %530 = vmatprep.subr.mxu0 0.0
        %531 = vmatpush1.xpose.msra.mxu0 0.0
        %532 = vmatprep.subr.mxu0 0.0
        %533 = vmatpush1.xpose.msra.mxu0 0.0
        %534 = vmatprep.mubr.f32.mxu0 0.0
        %535 = vmatmul.mubr.f32.gmra.mrb[0].mxu0 %v456
        %v536 = vpop.f32.mrb[0].mxu0
        %v537 = vadd.f32 %v452, %v536
        %v538 = vpop.f32.mrb[0].mxu0
        %539 = vdwg.mxu0
        %v540 = vmax.f32 %v537, 0.0
        %v541 = vld [vmem:[%s428] sm:$0xff]
        %v542 = vld [vmem:[%s428 + $0x8] sm:$0xff]
        %v543 = vld [vmem:[%s435] sm:$0x1]
        %v545 = vlaneseq
        %v546 = vshrl.u32 %v545, 7
        %v547 = vsub.s32 0, %v546
        %v548 = vrot.slane %v543, %v547
        %v551 = vsel %vm454, %v540, 0
        %v554 = vsel %vm454, %v541, 0
        %v557 = vsel %vm454, %v542, 0
        %559 = vmatprep.subr.mxu0 0.0
        %560 = vmatpush1.xpose.msra.mxu0 %v554
        %561 = vmatprep.subr.mxu0 0.0
        %562 = vmatpush1.xpose.msra.mxu0 %v557
        %563 = vmatprep.subr.mxu0 0.0
        %564 = vmatpush1.xpose.msra.mxu0 0.0
        %565 = vmatprep.subr.mxu0 0.0
        %566 = vmatpush1.xpose.msra.mxu0 0.0
        %567 = vmatprep.subr.mxu0 0.0
        %568 = vmatpush1.xpose.msra.mxu0 0.0
        %569 = vmatprep.subr.mxu0 0.0
        %570 = vmatpush1.xpose.msra.mxu0 0.0
        %571 = vmatprep.subr.mxu0 0.0
        %572 = vmatpush1.xpose.msra.mxu0 0.0
        %573 = vmatprep.subr.mxu0 0.0
        %574 = vmatpush1.xpose.msra.mxu0 0.0
        %575 = vmatprep.subr.mxu0 0.0
        %576 = vmatpush1.xpose.msra.mxu0 0.0
        %577 = vmatprep.subr.mxu0 0.0
        %578 = vmatpush1.xpose.msra.mxu0 0.0
        %579 = vmatprep.subr.mxu0 0.0
        %580 = vmatpush1.xpose.msra.mxu0 0.0
        %581 = vmatprep.subr.mxu0 0.0
        %582 = vmatpush1.xpose.msra.mxu0 0.0
        %583 = vmatprep.subr.mxu0 0.0
        %584 = vmatpush1.xpose.msra.mxu0 0.0
        %585 = vmatprep.subr.mxu0 0.0
        %586 = vmatpush1.xpose.msra.mxu0 0.0
        %587 = vmatprep.subr.mxu0 0.0
        %588 = vmatpush1.xpose.msra.mxu0 0.0
        %589 = vmatprep.subr.mxu0 0.0
        %590 = vmatpush1.xpose.msra.mxu0 0.0
        %591 = vmatprep.subr.mxu0 0.0
        %592 = vmatpush1.xpose.msra.mxu0 0.0
        %593 = vmatprep.subr.mxu0 0.0
        %594 = vmatpush1.xpose.msra.mxu0 0.0
        %595 = vmatprep.subr.mxu0 0.0
        %596 = vmatpush1.xpose.msra.mxu0 0.0
        %597 = vmatprep.subr.mxu0 0.0
        %598 = vmatpush1.xpose.msra.mxu0 0.0
        %599 = vmatprep.subr.mxu0 0.0
        %600 = vmatpush1.xpose.msra.mxu0 0.0
        %601 = vmatprep.subr.mxu0 0.0
        %602 = vmatpush1.xpose.msra.mxu0 0.0
        %603 = vmatprep.subr.mxu0 0.0
        %604 = vmatpush1.xpose.msra.mxu0 0.0
        %605 = vmatprep.subr.mxu0 0.0
        %606 = vmatpush1.xpose.msra.mxu0 0.0
        %607 = vmatprep.subr.mxu0 0.0
        %608 = vmatpush1.xpose.msra.mxu0 0.0
        %609 = vmatprep.subr.mxu0 0.0
        %610 = vmatpush1.xpose.msra.mxu0 0.0
        %611 = vmatprep.subr.mxu0 0.0
        %612 = vmatpush1.xpose.msra.mxu0 0.0
        %613 = vmatprep.subr.mxu0 0.0
        %614 = vmatpush1.xpose.msra.mxu0 0.0
        %615 = vmatprep.subr.mxu0 0.0
        %616 = vmatpush1.xpose.msra.mxu0 0.0
        %617 = vmatprep.subr.mxu0 0.0
        %618 = vmatpush1.xpose.msra.mxu0 0.0
        %619 = vmatprep.subr.mxu0 0.0
        %620 = vmatpush1.xpose.msra.mxu0 0.0
        %621 = vmatprep.subr.mxu0 0.0
        %622 = vmatpush1.xpose.msra.mxu0 0.0
        %623 = vmatprep.mubr.f32.mxu0 0.0
        %624 = vmatmul.mubr.f32.gmra.mrb[0].mxu0 %v551
        %v625 = vpop.f32.mrb[0].mxu0
        %v626 = vadd.f32 %v548, %v625
        %v627 = vpop.f32.mrb[0].mxu0
        %628 = vdwg.mxu0
        %vm629 = vcmask 130048
        %630 = vst.msk [vmem:[%s441] sm:$0xff] %vm629, %v626
        %p631 = scmp.lt.s32.totalorder %s19, 3
        %s632 = scalar_select %p631, %s19, 3
        %s633 = smul.addr %s632, 8
        %s634 = scalar_lea.vmem %s5, %s633
        // Predicated region
        $region45: #{model2_forward.2} parent=39 // pred_check
          %p635 = pneg %p207
        $region46: #{model2_forward.2} parent=39 // pred_check_branch
          %637 = sbr.rel (%p635) target = $region48
        $region47: #{model2_forward.2} parent=39 // pred_region
          _
        $region48: #{model2_forward.2} parent=39 // pred_fallthru
          _
      $region40: #{model2_forward.2} parent=5 // pred_fallthru
        _
      %p638 = scmp.le.s32.totalorder 2, %s14
      // Predicated region
      $region49: #{model2_forward.2} parent=5 // pred_check
        %p639 = pneg %p638
      $region50: #{model2_forward.2} parent=5 // pred_check_branch
        %641 = sbr.rel (%p639) target = $region52
      $region51: #{model2_forward.2} parent=5 // pred_region
        %s642 = ssub.s32 %s14, 2
        // Predicated region
        $region53: #{model2_forward.2} parent=51 // pred_check
          %p643 = pneg %p213
        $region54: #{model2_forward.2} parent=51 // pred_check_branch
          %645 = sbr.rel (%p643) target = $region56
        $region55: #{model2_forward.2} parent=51 // pred_region
          %p646 = scmp.lt.s32.totalorder %s20, 3
          %s647 = scalar_select %p646, %s20, 3
          %s648 = smul.addr %s647, 8
          %s649 = scalar_lea.vmem %s5, %s648
        $region56: #{model2_forward.2} parent=51 // pred_fallthru
          _
      $region52: #{model2_forward.2} parent=5 // pred_fallthru
        _
    $region6: #{model2_forward.2} parent=1 // loop_footer
      %s18 = sadd.s32 1, %s14
    $region7: #{model2_forward.2} parent=1 // loop_footer_branch
      %13 = sbr.rel target = $region3
    $region8: #{model2_forward.2} parent=1 // loop_exit
      _
    %650 = vsyncpa [#allocation3], 1
    %s651 = scalar_lea.sflag [#allocation3], 1
    %652 = vsyncpa %s651, 1

</llo_original>
